<compile_context>
chip_gen: v6e
topology: v6e:2x2x1
jax: 0.10.0
libtpu: 0.0.40
codegen_flags: <defaults>
</compile_context>

<pallas_src>
import functools

import jax
import jax.numpy as jnp
from jax import lax
from jax.experimental import pallas as pl
from jax.experimental.pallas import tpu as pltpu

_NEG_BIG = -1e30
_CONTRACT_CHANNELS = (((1,), (1,)), ((), ()))   # contract dim 1 of lhs with dim 1 of rhs


def _gat_layer_body(h_in_bf, w_aug_bf, att_src_bf, bias, adj_bias,
                    *, channels, negative_slope, apply_relu):
    """One GATConv (heads=1) on a dense additive-bias adjacency; values stay on-chip."""
    C = channels
    # Single augmented MXU pass: cols [0:C) = h, col C = a_dst, rest zero padding.
    hz = jnp.dot(h_in_bf, w_aug_bf, preferred_element_type=jnp.float32)    # (N, CP)
    h_bf = hz[:, :C].astype(jnp.bfloat16)                                  # (N, C)
    a_dst = hz[:, C:C + 1]                                                 # (N, 1) f32

    # a_src emitted directly as a lane-oriented (1, N) row on the MXU
    # (no (N,1)->(1,N) relayout needed).
    a_src = lax.dot_general(att_src_bf, h_bf, _CONTRACT_CHANNELS,
                            preferred_element_type=jnp.float32)            # (1, N)

    logits = a_dst + a_src                                                 # (N_dst, N_src)
    logits = jnp.maximum(logits, negative_slope * logits)                  # leaky_relu (exact, 0<slope<1)
    masked = logits + adj_bias                                             # bf16 mask upcasts to f32

    # Masked softmax over sources j; self loops guarantee >=1 valid entry per row,
    # and exp(-1e30 - m) underflows to exact 0, so no post-exp masking is needed.
    m = jnp.max(masked, axis=1, keepdims=True)
    e = jnp.exp(masked - m)                                                # (N, N) f32 in [0, 1]
    denom = jnp.sum(e, axis=1, keepdims=True)                              # (N, 1)

    # Aggregate with UNNORMALIZED weights; rescale the (N, C) result afterwards
    # (moves the normalization multiply off the (N, N) tile).
    agg = jnp.dot(e.astype(jnp.bfloat16), h_bf,
                  preferred_element_type=jnp.float32)                      # (N, C)  MXU
    out = agg * pl.reciprocal(denom, approx=True) + bias                   # EUP reciprocal
    if apply_relu:
        out = jnp.maximum(out, 0.0)
    return out


def gnn_kernel(x_ref, w_aug_ref, att_src_ref, bias_ref, adj_ref, out_ref,
               *, channels: int, negative_slope: float = 0.2):
    """Fused conv2(relu(conv1(x))) — single kernel, intermediate stays in VMEM."""
    adj_bias = adj_ref[...]                                                # loaded once, reused by both layers
    h1 = _gat_layer_body(x_ref[...], w_aug_ref[0],
                         att_src_ref[0:1, :], bias_ref[0:1, :], adj_bias,
                         channels=channels, negative_slope=negative_slope,
                         apply_relu=True)
    out = _gat_layer_body(h1.astype(jnp.bfloat16), w_aug_ref[1],
                          att_src_ref[1:2, :], bias_ref[1:2, :], adj_bias,
                          channels=channels, negative_slope=negative_slope,
                          apply_relu=False)
    out_ref[...] = out.astype(out_ref.dtype)


def build_adj_bias(edge_index, num_nodes):
    """Additive mask: 0.0 where edge j -> i exists (plus self loops), else -1e30 (bf16)."""
    src, dst = edge_index[0], edge_index[1]
    adj = jnp.zeros((num_nodes, num_nodes), jnp.float32)
    adj = adj.at[dst, src].set(1.0)
    adj = jnp.maximum(adj, jnp.eye(num_nodes, dtype=jnp.float32))          # add_self_loops
    return jnp.where(adj > 0.0, 0.0, _NEG_BIG).astype(jnp.bfloat16)


def init_gat_params(key, channels):
    """Deterministic glorot-style init matching GATConv param shapes (heads=1)."""
    k_w, k_as, k_ad = jax.random.split(key, 3)
    scale_w = jnp.sqrt(6.0 / (channels + channels))
    w = jax.random.uniform(k_w, (channels, channels), jnp.float32, -scale_w, scale_w)
    scale_a = jnp.sqrt(6.0 / (channels + 1))
    att_src = jax.random.uniform(k_as, (1, channels), jnp.float32, -scale_a, scale_a)
    att_dst = jax.random.uniform(k_ad, (1, channels), jnp.float32, -scale_a, scale_a)
    bias = jnp.zeros((1, channels), jnp.float32)
    return w, att_src, att_dst, bias


def gnn_forward(x, edge_index, params1, params2):
    N, C = x.shape
    CP = ((C + 1 + 127) // 128) * 128          # augmented width, padded to 128-lane multiple

    def make_w_aug(w, att_dst):
        # Fold the att_dst reduction into the feature matmul:
        #   (x @ W) @ att_dst^T == x @ (W @ att_dst^T)  -> extra column of W_aug.
        a_dst_col = w @ att_dst.reshape(C, 1)                              # (C, 1)
        w_aug = jnp.concatenate([w, a_dst_col], axis=1)                    # (C, C+1)
        w_aug = jnp.pad(w_aug, ((0, 0), (0, CP - (C + 1))))                # (C, CP)
        return w_aug.astype(jnp.bfloat16)

    w1, as1, ad1, b1 = params1
    w2, as2, ad2, b2 = params2

    w_aug = jnp.stack([make_w_aug(w1, ad1), make_w_aug(w2, ad2)])          # (2, C, CP) bf16
    att_src_pack = jnp.concatenate([as1, as2], axis=0).astype(jnp.bfloat16)  # (2, C) bf16
    bias_pack = jnp.concatenate([b1, b2], axis=0)                          # (2, C) f32
    adj_bias = build_adj_bias(edge_index, N)                               # (N, N) bf16
    x_bf = x.astype(jnp.bfloat16)                                          # pre-cast: smaller DMA, no in-kernel cast

    vmem = pl.BlockSpec(memory_space=pltpu.MemorySpace.VMEM)
    kernel = functools.partial(gnn_kernel, channels=C, negative_slope=0.2)

    return pl.pallas_call(
        kernel,
        out_shape=jax.ShapeDtypeStruct((N, C), jnp.float32),
        in_specs=[vmem] * 5,
        out_specs=vmem,
    )(x_bf, w_aug, att_src_pack, bias_pack, adj_bias)


def gnn_reference(x, adj_bias, params1, params2, negative_slope=0.2):
    """Pure-JAX f32 reference of the same dense-adjacency GAT math."""
    adj_bias = adj_bias.astype(jnp.float32)

    def layer(h_in, w, att_src, att_dst, bias, relu):
        h = h_in @ w
        a_src = jnp.sum(h * att_src, axis=-1)
        a_dst = jnp.sum(h * att_dst, axis=-1)
        logits = a_dst[:, None] + a_src[None, :]
        logits = jnp.where(logits >= 0.0, logits, negative_slope * logits)
        attn = jax.nn.softmax(logits + adj_bias, axis=1)
        out = attn @ h + bias
        return jnp.maximum(out, 0.0) if relu else out

    h = layer(x, *params1, True)
    return layer(h, *params2, False)


if __name__ == "__main__":
    key = jax.random.PRNGKey(0)
    k_x, k_src, k_dst, k_p1, k_p2 = jax.random.split(key, 5)

    num_nodes = 16          # N
    hidden_channels = 128   # C (lane-aligned)
    num_edges = 40          # E

    x = jax.random.normal(k_x, (num_nodes, hidden_channels), jnp.float32)
    src = jax.random.randint(k_src, (num_edges,), 0, num_nodes, jnp.int32)
    dst = jax.random.randint(k_dst, (num_edges,), 0, num_nodes, jnp.int32)
    edge_index = jnp.stack([src, dst])   # [2, E], row 0 = source, row 1 = target

    params1 = init_gat_params(k_p1, hidden_channels)
    params2 = init_gat_params(k_p2, hidden_channels)

    out = gnn_forward(x, edge_index, params1, params2)
    out = jax.block_until_ready(out)

    ref = gnn_reference(x, build_adj_bias(edge_index, num_nodes), params1, params2)
    err = float(jnp.max(jnp.abs(out - ref)))

    assert out.shape == (num_nodes, hidden_channels)
    assert bool(jnp.all(jnp.isfinite(out)))
    assert err < 0.3, f"max|kernel - f32 reference| = {err}"   # bf16 matmuls + approx reciprocal, loose bound
    print("KERNEL_OK")
</pallas_src>

<mosaic_0001>
module attributes {stable_mosaic.version = 11 : i64} {
  func.func @gnn_kernel(%arg0: memref<16x128xbf16, #tpu.memory_space<vmem>>, %arg1: memref<2x128x256xbf16, #tpu.memory_space<vmem>>, %arg2: memref<2x128xbf16, #tpu.memory_space<vmem>>, %arg3: memref<2x128xf32, #tpu.memory_space<vmem>>, %arg4: memref<16x16xbf16, #tpu.memory_space<vmem>>, %arg5: memref<16x128xf32, #tpu.memory_space<vmem>>) attributes {dimension_semantics = [], scalar_prefetch = 0 : i64, scratch_operands = 0 : i64, tpu.core_type = #tpu.core_type<tc>} {
    %c0 = arith.constant 0 : index
    %c0_0 = arith.constant 0 : index
    %0 = vector.load %arg4[%c0, %c0_0] : memref<16x16xbf16, #tpu.memory_space<vmem>>, vector<16x16xbf16>
    %c0_1 = arith.constant 0 : index
    %c0_2 = arith.constant 0 : index
    %1 = vector.load %arg0[%c0_1, %c0_2] : memref<16x128xbf16, #tpu.memory_space<vmem>>, vector<16x128xbf16>
    %c0_3 = arith.constant 0 : index
    %c0_4 = arith.constant 0 : index
    %c0_5 = arith.constant 0 : index
    %2 = vector.load %arg1[%c0_3, %c0_4, %c0_5] : memref<2x128x256xbf16, #tpu.memory_space<vmem>>, vector<1x128x256xbf16>
    %3 = vector.shape_cast %2 : vector<1x128x256xbf16> to vector<128x256xbf16>
    %c0_6 = arith.constant 0 : index
    %c0_7 = arith.constant 0 : index
    %4 = vector.load %arg2[%c0_6, %c0_7] : memref<2x128xbf16, #tpu.memory_space<vmem>>, vector<1x128xbf16>
    %c0_8 = arith.constant 0 : index
    %c0_9 = arith.constant 0 : index
    %5 = vector.load %arg3[%c0_8, %c0_9] : memref<2x128xf32, #tpu.memory_space<vmem>>, vector<1x128xf32>
    %cst = arith.constant dense<0.000000e+00> : vector<16x256xf32>
    %6 = tpu.matmul %1, %3, %cst {dimension_numbers = #tpu.dot_dimension_numbers<[1], [0], [0], [1], [0, 0, 1, 1], [], []>} : vector<16x128xbf16>, vector<128x256xbf16>, vector<16x256xf32> -> vector<16x256xf32>
    %7 = vector.extract_strided_slice %6 {offsets = [0, 0], sizes = [16, 128], strides = [1, 1]} : vector<16x256xf32> to vector<16x128xf32>
    %8 = arith.truncf %7 : vector<16x128xf32> to vector<16x128xbf16>
    %9 = vector.extract_strided_slice %6 {offsets = [0, 128], sizes = [16, 1], strides = [1, 1]} : vector<16x256xf32> to vector<16x1xf32>
    %cst_10 = arith.constant dense<0.000000e+00> : vector<1x16xf32>
    %10 = tpu.matmul %4, %8, %cst_10 {dimension_numbers = #tpu.dot_dimension_numbers<[1], [1], [0], [0], [0, 0, 1, 0], [], []>} : vector<1x128xbf16>, vector<16x128xbf16>, vector<1x16xf32> -> vector<1x16xf32>
    %11 = vector.broadcast %9 : vector<16x1xf32> to vector<16x16xf32>
    %12 = vector.broadcast %10 : vector<1x16xf32> to vector<16x16xf32>
    %13 = arith.addf %11, %12 : vector<16x16xf32>
    %cst_11 = arith.constant 2.000000e-01 : f32
    %14 = vector.broadcast %cst_11 : f32 to vector<16x16xf32>
    %15 = arith.mulf %14, %13 : vector<16x16xf32>
    %16 = arith.maximumf %13, %15 : vector<16x16xf32>
    %17 = arith.extf %0 : vector<16x16xbf16> to vector<16x16xf32>
    %18 = arith.addf %16, %17 : vector<16x16xf32>
    %cst_12 = arith.constant dense<0xFF800000> : vector<16xf32>
    %19 = vector.multi_reduction <maximumf>, %18, %cst_12 [1] : vector<16x16xf32> to vector<16xf32>
    %20 = vector.shape_cast %19 : vector<16xf32> to vector<16x1xf32>
    %21 = vector.broadcast %20 : vector<16x1xf32> to vector<16x16xf32>
    %22 = arith.subf %18, %21 : vector<16x16xf32>
    %23 = math.exp %22 : vector<16x16xf32>
    %cst_13 = arith.constant dense<0.000000e+00> : vector<16xf32>
    %24 = vector.multi_reduction <add>, %23, %cst_13 [1] : vector<16x16xf32> to vector<16xf32>
    %25 = vector.shape_cast %24 : vector<16xf32> to vector<16x1xf32>
    %26 = arith.truncf %23 : vector<16x16xf32> to vector<16x16xbf16>
    %cst_14 = arith.constant dense<0.000000e+00> : vector<16x128xf32>
    %27 = tpu.matmul %26, %8, %cst_14 {dimension_numbers = #tpu.dot_dimension_numbers<[1], [0], [0], [1], [0, 0, 1, 1], [], []>} : vector<16x16xbf16>, vector<16x128xbf16>, vector<16x128xf32> -> vector<16x128xf32>
    %28 = tpu.reciprocal %25 {approx = true} : vector<16x1xf32> -> vector<16x1xf32>
    %29 = vector.broadcast %28 : vector<16x1xf32> to vector<16x128xf32>
    %30 = arith.mulf %27, %29 : vector<16x128xf32>
    %31 = vector.broadcast %5 : vector<1x128xf32> to vector<16x128xf32>
    %32 = arith.addf %30, %31 : vector<16x128xf32>
    %cst_15 = arith.constant 0.000000e+00 : f32
    %33 = vector.broadcast %cst_15 : f32 to vector<16x128xf32>
    %34 = arith.maximumf %32, %33 : vector<16x128xf32>
    %35 = arith.truncf %34 : vector<16x128xf32> to vector<16x128xbf16>
    %c1 = arith.constant 1 : index
    %c0_16 = arith.constant 0 : index
    %c0_17 = arith.constant 0 : index
    %36 = vector.load %arg1[%c1, %c0_16, %c0_17] : memref<2x128x256xbf16, #tpu.memory_space<vmem>>, vector<1x128x256xbf16>
    %37 = vector.shape_cast %36 : vector<1x128x256xbf16> to vector<128x256xbf16>
    %c1_18 = arith.constant 1 : index
    %c0_19 = arith.constant 0 : index
    %38 = vector.load %arg2[%c1_18, %c0_19] : memref<2x128xbf16, #tpu.memory_space<vmem>>, vector<1x128xbf16>
    %c1_20 = arith.constant 1 : index
    %c0_21 = arith.constant 0 : index
    %39 = vector.load %arg3[%c1_20, %c0_21] : memref<2x128xf32, #tpu.memory_space<vmem>>, vector<1x128xf32>
    %cst_22 = arith.constant dense<0.000000e+00> : vector<16x256xf32>
    %40 = tpu.matmul %35, %37, %cst_22 {dimension_numbers = #tpu.dot_dimension_numbers<[1], [0], [0], [1], [0, 0, 1, 1], [], []>} : vector<16x128xbf16>, vector<128x256xbf16>, vector<16x256xf32> -> vector<16x256xf32>
    %41 = vector.extract_strided_slice %40 {offsets = [0, 0], sizes = [16, 128], strides = [1, 1]} : vector<16x256xf32> to vector<16x128xf32>
    %42 = arith.truncf %41 : vector<16x128xf32> to vector<16x128xbf16>
    %43 = vector.extract_strided_slice %40 {offsets = [0, 128], sizes = [16, 1], strides = [1, 1]} : vector<16x256xf32> to vector<16x1xf32>
    %cst_23 = arith.constant dense<0.000000e+00> : vector<1x16xf32>
    %44 = tpu.matmul %38, %42, %cst_23 {dimension_numbers = #tpu.dot_dimension_numbers<[1], [1], [0], [0], [0, 0, 1, 0], [], []>} : vector<1x128xbf16>, vector<16x128xbf16>, vector<1x16xf32> -> vector<1x16xf32>
    %45 = vector.broadcast %43 : vector<16x1xf32> to vector<16x16xf32>
    %46 = vector.broadcast %44 : vector<1x16xf32> to vector<16x16xf32>
    %47 = arith.addf %45, %46 : vector<16x16xf32>
    %cst_24 = arith.constant 2.000000e-01 : f32
    %48 = vector.broadcast %cst_24 : f32 to vector<16x16xf32>
    %49 = arith.mulf %48, %47 : vector<16x16xf32>
    %50 = arith.maximumf %47, %49 : vector<16x16xf32>
    %51 = arith.extf %0 : vector<16x16xbf16> to vector<16x16xf32>
    %52 = arith.addf %50, %51 : vector<16x16xf32>
    %cst_25 = arith.constant dense<0xFF800000> : vector<16xf32>
    %53 = vector.multi_reduction <maximumf>, %52, %cst_25 [1] : vector<16x16xf32> to vector<16xf32>
    %54 = vector.shape_cast %53 : vector<16xf32> to vector<16x1xf32>
    %55 = vector.broadcast %54 : vector<16x1xf32> to vector<16x16xf32>
    %56 = arith.subf %52, %55 : vector<16x16xf32>
    %57 = math.exp %56 : vector<16x16xf32>
    %cst_26 = arith.constant dense<0.000000e+00> : vector<16xf32>
    %58 = vector.multi_reduction <add>, %57, %cst_26 [1] : vector<16x16xf32> to vector<16xf32>
    %59 = vector.shape_cast %58 : vector<16xf32> to vector<16x1xf32>
    %60 = arith.truncf %57 : vector<16x16xf32> to vector<16x16xbf16>
    %cst_27 = arith.constant dense<0.000000e+00> : vector<16x128xf32>
    %61 = tpu.matmul %60, %42, %cst_27 {dimension_numbers = #tpu.dot_dimension_numbers<[1], [0], [0], [1], [0, 0, 1, 1], [], []>} : vector<16x16xbf16>, vector<16x128xbf16>, vector<16x128xf32> -> vector<16x128xf32>
    %62 = tpu.reciprocal %59 {approx = true} : vector<16x1xf32> -> vector<16x1xf32>
    %63 = vector.broadcast %62 : vector<16x1xf32> to vector<16x128xf32>
    %64 = arith.mulf %61, %63 : vector<16x128xf32>
    %65 = vector.broadcast %39 : vector<1x128xf32> to vector<16x128xf32>
    %66 = arith.addf %64, %65 : vector<16x128xf32>
    %c0_28 = arith.constant 0 : index
    %c0_29 = arith.constant 0 : index
    %67 = vector.load %arg5[%c0_28, %c0_29] : memref<16x128xf32, #tpu.memory_space<vmem>>, vector<16x128xf32>
    tpu.vector_store %arg5[%c0_28, %c0_29], %66 {strides = array<i32>} : memref<16x128xf32, #tpu.memory_space<vmem>>, vector<16x128xf32>,
    return
  }
}

</mosaic_0001>

<llo_original>
// kernel: tpu_custom_call.1
$region0: #{tpu_custom_call.1}
  #allocation0 [shape = 'u32[]', space=smem, size = 0x4, offset = 0x4, fixed_abs, tag = 'smem constant byte address 0x4 - core index']
  #allocation1 [shape = 'u32[144,128]{1,0:T(1,128)}', space=vmem, size = 0x12000, scoped, tag = 'internal scratch']
  %s0 = inlined_call_operand.hbm [shape: bf16[16,128], index: 0, kind: input, shape index: {}]
  %s1 = inlined_call_operand.hbm [shape: bf16[2,128,256], index: 1, kind: input, shape index: {}]
  %s2 = inlined_call_operand.vmem [shape: bf16[2,128], index: 2, kind: input, shape index: {}]
  %s3 = inlined_call_operand.vmem [shape: f32[2,128], index: 3, kind: input, shape index: {}]
  %s4 = inlined_call_operand.hbm [shape: bf16[16,16], index: 4, kind: input, shape index: {}]
  %s5 = inlined_call_operand.hbm [shape: f32[16,128], index: 5, kind: output, shape index: {}]
  %s6 = sld [smem:[#allocation0]]
  $region42: #{tpu_custom_call.1} parent=0
    _
  %s8 = ssub.s32 1, %s6
  %s9 = scalar_select 0, %s8, %s6
  $region1: #{tpu_custom_call.1} parent=0
    #allocation2 [shape = 'u8[4096]{0}', space=vmem, size = 0x1000, scoped, tag = 'input window, operand 0, single buffered']
    #allocation3 [shape = 's32[1]{0}', space=sflag, size = 0x4, scoped, tag = 'scoped memory for tpu_custom_call.1']
    #allocation4 [shape = 's32[1]{0}', space=sflag, size = 0x4, scoped, tag = 'scoped memory for tpu_custom_call.1']
    #allocation5 [shape = 'u8[131072]{0}', space=vmem, size = 0x20000, scoped, tag = 'input window, operand 1, single buffered']
    #allocation6 [shape = 's32[1]{0}', space=sflag, size = 0x4, scoped, tag = 'scoped memory for tpu_custom_call.1']
    #allocation7 [shape = 'u8[4096]{0}', space=vmem, size = 0x1000, scoped, tag = 'input window, operand 4, single buffered']
    #allocation8 [shape = 'u8[8192]{0}', space=vmem, size = 0x2000, scoped, tag = 'output window, operand 0, single buffered']
    %10 = vsyncpa [#allocation3], 0
    %11 = vsyncpa [#allocation6], 0
    %12 = vsyncpa [#allocation4], 0
    // Predicated region
    $region2: #{tpu_custom_call.1} parent=1 // pred_check
      _
    $region3: #{tpu_custom_call.1} parent=1 // pred_check_branch
      %14 = sbr.rel (0) target = $region5
    $region4: #{tpu_custom_call.1} parent=1 // pred_region
      %s16 = ssub.s32 128, 128
      %17 = vsyncadd [#allocation3], %s16
      %s18 = sshll.u32 [#allocation2], 4
      %s19 = int_to_ptr.vmem [resolvable:$true] %s18
      %24 = dma.hbm_to_vmem [thread:$0]  %s0, 128, %s19, [#allocation3], 64, 64, 4
    $region5: #{tpu_custom_call.1} parent=1 // pred_fallthru
      _
    // Predicated region
    $region6: #{tpu_custom_call.1} parent=1 // pred_check
      _
    $region7: #{tpu_custom_call.1} parent=1 // pred_check_branch
      %26 = sbr.rel (0) target = $region9
    $region8: #{tpu_custom_call.1} parent=1 // pred_region
      %s28 = ssub.s32 4096, 4096
      %29 = vsyncadd [#allocation6], %s28
      %s30 = sshll.u32 [#allocation5], 4
      %s31 = int_to_ptr.vmem [resolvable:$true] %s30
      %36 = dma.hbm_to_vmem [thread:$0]  %s1, 4096, %s31, [#allocation6], 128, 128, 8
    $region9: #{tpu_custom_call.1} parent=1 // pred_fallthru
      _
    // Predicated region
    $region10: #{tpu_custom_call.1} parent=1 // pred_check
      _
    $region11: #{tpu_custom_call.1} parent=1 // pred_check_branch
      %38 = sbr.rel (0) target = $region13
    $region12: #{tpu_custom_call.1} parent=1 // pred_region
      _
    $region13: #{tpu_custom_call.1} parent=1 // pred_fallthru
      _
    // Predicated region
    $region14: #{tpu_custom_call.1} parent=1 // pred_check
      _
    $region15: #{tpu_custom_call.1} parent=1 // pred_check_branch
      %40 = sbr.rel (0) target = $region17
    $region16: #{tpu_custom_call.1} parent=1 // pred_region
      _
    $region17: #{tpu_custom_call.1} parent=1 // pred_fallthru
      _
    // Predicated region
    $region18: #{tpu_custom_call.1} parent=1 // pred_check
      _
    $region19: #{tpu_custom_call.1} parent=1 // pred_check_branch
      %42 = sbr.rel (0) target = $region21
    $region20: #{tpu_custom_call.1} parent=1 // pred_region
      %s44 = ssub.s32 128, 128
      %45 = vsyncadd [#allocation6], %s44
      %s46 = sshll.u32 [#allocation7], 4
      %s47 = int_to_ptr.vmem [resolvable:$true] %s46
      %52 = dma.hbm_to_vmem [thread:$0]  %s4, 128, %s47, [#allocation6], 64, 64, 4
    $region21: #{tpu_custom_call.1} parent=1 // pred_fallthru
      _
    // Predicated region
    $region22: #{tpu_custom_call.1} parent=1 // pred_check
      _
    $region23: #{tpu_custom_call.1} parent=1 // pred_check_branch
      %54 = sbr.rel (0) target = $region25
    $region24: #{tpu_custom_call.1} parent=1 // pred_region
      %55 = dma.done [#allocation3], 128
    $region25: #{tpu_custom_call.1} parent=1 // pred_fallthru
      _
    // Predicated region
    $region26: #{tpu_custom_call.1} parent=1 // pred_check
      _
    $region27: #{tpu_custom_call.1} parent=1 // pred_check_branch
      %57 = sbr.rel (0) target = $region29
    $region28: #{tpu_custom_call.1} parent=1 // pred_region
      %58 = dma.done [#allocation6], 4096
    $region29: #{tpu_custom_call.1} parent=1 // pred_fallthru
      _
    // Predicated region
    $region30: #{tpu_custom_call.1} parent=1 // pred_check
      _
    $region31: #{tpu_custom_call.1} parent=1 // pred_check_branch
      %60 = sbr.rel (0) target = $region33
    $region32: #{tpu_custom_call.1} parent=1 // pred_region
      %61 = dma.done [#allocation6], 128
    $region33: #{tpu_custom_call.1} parent=1 // pred_fallthru
      _
    %v63 = vld [vmem:[#allocation7] sm:$0xf]
    %v64 = vld [vmem:[#allocation7 + $0x4] sm:$0xf]
    %v65 = vld [vmem:[#allocation2] sm:$0xf]
    %v66 = vld [vmem:[#allocation2 + $0x4] sm:$0xf]
    %v67 = vld [vmem:[#allocation5] sm:$0xff]
    %v68 = vld [vmem:[#allocation5 + $0x8] sm:$0xff]
    %v69 = vld [vmem:[#allocation5 + $0x10] sm:$0xff]
    %v70 = vld [vmem:[#allocation5 + $0x18] sm:$0xff]
    %v71 = vld [vmem:[#allocation5 + $0x20] sm:$0xff]
    %v72 = vld [vmem:[#allocation5 + $0x28] sm:$0xff]
    %v73 = vld [vmem:[#allocation5 + $0x30] sm:$0xff]
    %v74 = vld [vmem:[#allocation5 + $0x38] sm:$0xff]
    %v75 = vld [vmem:[#allocation5 + $0x40] sm:$0xff]
    %v76 = vld [vmem:[#allocation5 + $0x48] sm:$0xff]
    %v77 = vld [vmem:[#allocation5 + $0x50] sm:$0xff]
    %v78 = vld [vmem:[#allocation5 + $0x58] sm:$0xff]
    %v79 = vld [vmem:[#allocation5 + $0x60] sm:$0xff]
    %v80 = vld [vmem:[#allocation5 + $0x68] sm:$0xff]
    %v81 = vld [vmem:[#allocation5 + $0x70] sm:$0xff]
    %v82 = vld [vmem:[#allocation5 + $0x78] sm:$0xff]
    %v83 = vld [vmem:[%s2] sm:$0x1]
    %v84 = vld [vmem:[%s3] sm:$0x1]
    %v87 = vunpack.c.l.b16 %v65
    %v88 = vunpack.c.l.b16 %v66
    %v89 = vpack.c.b16 %v88, %v87
    %v107 = vunpack.c.l.b16 %v67
    %v108 = vunpack.c.h.b16 %v67
    %v109 = vunpack.c.l.b16 %v68
    %v110 = vunpack.c.h.b16 %v68
    %v111 = vunpack.c.l.b16 %v69
    %v112 = vunpack.c.h.b16 %v69
    %v113 = vunpack.c.l.b16 %v70
    %v114 = vunpack.c.h.b16 %v70
    %v115 = vunpack.c.l.b16 %v71
    %v116 = vunpack.c.h.b16 %v71
    %v117 = vunpack.c.l.b16 %v72
    %v118 = vunpack.c.h.b16 %v72
    %v119 = vunpack.c.l.b16 %v73
    %v120 = vunpack.c.h.b16 %v73
    %v121 = vunpack.c.l.b16 %v74
    %v122 = vunpack.c.h.b16 %v74
    %v123 = vunpack.c.l.b16 %v75
    %v124 = vunpack.c.h.b16 %v75
    %v125 = vunpack.c.l.b16 %v76
    %v126 = vunpack.c.h.b16 %v76
    %v127 = vunpack.c.l.b16 %v77
    %v128 = vunpack.c.h.b16 %v77
    %v129 = vunpack.c.l.b16 %v78
    %v130 = vunpack.c.h.b16 %v78
    %v131 = vunpack.c.l.b16 %v79
    %v132 = vunpack.c.h.b16 %v79
    %v133 = vunpack.c.l.b16 %v80
    %v134 = vunpack.c.h.b16 %v80
    %v135 = vunpack.c.l.b16 %v81
    %v136 = vunpack.c.h.b16 %v81
    %v137 = vunpack.c.l.b16 %v82
    %v138 = vunpack.c.h.b16 %v82
    %v139 = vpack.c.b16 %v109, %v107
    %v140 = vpack.c.b16 %v110, %v108
    %v141 = vpack.c.b16 %v113, %v111
    %v142 = vpack.c.b16 %v114, %v112
    %v143 = vpack.c.b16 %v117, %v115
    %v144 = vpack.c.b16 %v118, %v116
    %v145 = vpack.c.b16 %v121, %v119
    %v146 = vpack.c.b16 %v122, %v120
    %v147 = vpack.c.b16 %v125, %v123
    %v148 = vpack.c.b16 %v126, %v124
    %v149 = vpack.c.b16 %v129, %v127
    %v150 = vpack.c.b16 %v130, %v128
    %v151 = vpack.c.b16 %v133, %v131
    %v152 = vpack.c.b16 %v134, %v132
    %v153 = vpack.c.b16 %v137, %v135
    %v154 = vpack.c.b16 %v138, %v136
    %171 = vmatprep.subr.bf16.mxu0 %v154
    %172 = vmatpush1.bf16.msra.mxu0 %v153
    %173 = vmatprep.subr.bf16.mxu0 %v152
    %174 = vmatpush1.bf16.msra.mxu0 %v151
    %175 = vmatprep.subr.bf16.mxu0 %v150
    %176 = vmatpush1.bf16.msra.mxu0 %v149
    %177 = vmatprep.subr.bf16.mxu0 %v148
    %178 = vmatpush1.bf16.msra.mxu0 %v147
    %179 = vmatprep.subr.bf16.mxu0 %v146
    %180 = vmatpush1.bf16.msra.mxu0 %v145
    %181 = vmatprep.subr.bf16.mxu0 %v144
    %182 = vmatpush1.bf16.msra.mxu0 %v143
    %183 = vmatprep.subr.bf16.mxu0 %v142
    %184 = vmatpush1.bf16.msra.mxu0 %v141
    %185 = vmatprep.subr.bf16.mxu0 %v140
    %186 = vmatpush1.bf16.msra.mxu0 %v139
    %187 = vmatprep.subr.bf16.mxu0 0
    %188 = vmatpush2.bf16.msra.mxu0 0
    %189 = vmatprep.subr.bf16.mxu0 0
    %190 = vmatpush2.bf16.msra.mxu0 0
    %191 = vmatprep.subr.bf16.mxu0 0
    %192 = vmatpush2.bf16.msra.mxu0 0
    %193 = vmatprep.subr.bf16.mxu0 0
    %194 = vmatpush2.bf16.msra.mxu0 0
    %195 = vmatprep.subr.bf16.mxu0 0
    %196 = vmatpush2.bf16.msra.mxu0 0
    %197 = vmatprep.subr.bf16.mxu0 0
    %198 = vmatpush2.bf16.msra.mxu0 0
    %199 = vmatprep.subr.bf16.mxu0 0
    %200 = vmatpush2.bf16.msra.mxu0 0
    %201 = vmatprep.subr.bf16.mxu0 0
    %202 = vmatpush2.bf16.msra.mxu0 0
    %203 = vmatprep.mubr.bf16.mxu0 0
    %204 = vmatmul.mubr.bf16.gmra.mxu0 %v89
    %v205 = vpop.f32.mrf.mxu0
    %v206 = vadd.f32 0.0, %v205
    %v207 = vpop.f32.mrf.mxu0
    %v208 = vadd.f32 0.0, %v207
    %v209 = vpop.f32.mrf.mxu0
    %v210 = vadd.f32 0.0, %v209
    %v211 = vpop.f32.mrf.mxu0
    %v212 = vadd.f32 0.0, %v211
    %213 = vdwg.mxu0
    %v214 = vpack.c.bf16 %v210, %v206
    %215 = vmatprep.subr.bf16.mxu0 0
    %216 = vmatpush1.bf16.xpose.msra.mxu0 0
    %217 = vmatprep.subr.bf16.mxu0 0
    %218 = vmatpush1.bf16.xpose.msra.mxu0 0
    %219 = vmatprep.subr.bf16.mxu0 0
    %220 = vmatpush1.bf16.xpose.msra.mxu0 0
    %221 = vmatprep.subr.bf16.mxu0 0
    %222 = vmatpush1.bf16.xpose.msra.mxu0 0
    %223 = vmatprep.subr.bf16.mxu0 0
    %224 = vmatpush1.bf16.xpose.msra.mxu0 0
    %225 = vmatprep.subr.bf16.mxu0 0
    %226 = vmatpush1.bf16.xpose.msra.mxu0 0
    %227 = vmatprep.subr.bf16.mxu0 0
    %228 = vmatpush1.bf16.xpose.msra.mxu0 0
    %229 = vmatprep.subr.bf16.mxu0 0
    %230 = vmatpush1.bf16.xpose.msra.mxu0 %v214
    %231 = vmatprep.subr.bf16.mxu0 0
    %232 = vmatpush2.bf16.xpose.msra.mxu0 0
    %233 = vmatprep.subr.bf16.mxu0 0
    %234 = vmatpush2.bf16.xpose.msra.mxu0 0
    %235 = vmatprep.subr.bf16.mxu0 0
    %236 = vmatpush2.bf16.xpose.msra.mxu0 0
    %237 = vmatprep.subr.bf16.mxu0 0
    %238 = vmatpush2.bf16.xpose.msra.mxu0 0
    %239 = vmatprep.subr.bf16.mxu0 0
    %240 = vmatpush2.bf16.xpose.msra.mxu0 0
    %241 = vmatprep.subr.bf16.mxu0 0
    %242 = vmatpush2.bf16.xpose.msra.mxu0 0
    %243 = vmatprep.subr.bf16.mxu0 0
    %244 = vmatpush2.bf16.xpose.msra.mxu0 0
    %245 = vmatprep.subr.bf16.mxu0 0
    %246 = vmatpush2.bf16.xpose.msra.mxu0 0
    %247 = vmatprep.mubr.bf16.mxu0 0
    %248 = vmatmul.mubr.bf16.gmra.mxu0 %v83
    %v249 = vpop.f32.mrf.mxu0
    %v250 = vadd.f32 0.0, %v249
    %v251 = vpop.f32.mrf.mxu0
    %v252 = vpop.f32.mrf.mxu0
    %v253 = vpop.f32.mrf.mxu0
    %254 = vdwg.mxu0
    %256 = vset.pattern.permute.xlu0 0
    %257 = vperm.xlu0 %256, %v208
    %v258 = vpop.permute.xlu0 %257
    %261 = vset.pattern.permute.xlu0 0
    %262 = vperm.xlu0 %261, %v212
    %v263 = vpop.permute.xlu0 %262
    %v265 = vlaneseq
    %v266 = vshrl.u32 %v265, 7
    %v267 = vsub.s32 0, %v266
    %v268 = vrot.slane %v250, %v267
    %v269 = vadd.f32 %v258, %v268
    %v270 = vadd.f32 %v263, %v268
    %v271 = vmul.f32 %v269, 0.2
    %v272 = vmul.f32 %v270, 0.2
    %v273 = vmax.f32 %v269, %v271
    %v274 = vmax.f32 %v270, %v272
    %v275 = vunpack.c.l.bf16 %v63
    %v276 = vunpack.c.l.bf16 %v64
    %v277 = vadd.f32 %v273, %v275
    %v278 = vadd.f32 %v274, %v276
    %vm279 = vcmask 130048
    %v280 = vsel %vm279, %v277, -inf
    %281 = vmax.xlane.f32.xlu0 %v280
    %v282 = vpop.xlane.xlu0 %281
    %v283 = vsel %vm279, %v278, -inf
    %284 = vmax.xlane.f32.xlu0 %v283
    %v285 = vpop.xlane.xlu0 %284
    %v286 = vsub.f32 %v277, %v282
    %v287 = vsub.f32 %v278, %v285
    %v288 = vmul.f32 %v286, 1.442695
    %v289 = vpow.pop %v288
    %v290 = vmul.f32 %v287, 1.442695
    %v291 = vpow.pop %v290
    %v292 = vsel %vm279, %v289, 0.0
    %293 = vadd.xlane.f32.xlu0 %v292
    %v294 = vpop.xlane.xlu0 %293
    %v295 = vsel %vm279, %v291, 0.0
    %296 = vadd.xlane.f32.xlu0 %v295
    %v297 = vpop.xlane.xlu0 %296
    %v298 = vpack.c.bf16 %v291, %v289
    %v300 = vsel %vm279, %v298, 0
    %302 = vmatprep.subr.bf16.mxu0 0
    %303 = vmatpush1.bf16.msra.mxu0 0
    %304 = vmatprep.subr.bf16.mxu0 0
    %305 = vmatpush1.bf16.msra.mxu0 0
    %306 = vmatprep.subr.bf16.mxu0 0
    %307 = vmatpush1.bf16.msra.mxu0 0
    %308 = vmatprep.subr.bf16.mxu0 0
    %309 = vmatpush1.bf16.msra.mxu0 0
    %310 = vmatprep.subr.bf16.mxu0 0
    %311 = vmatpush1.bf16.msra.mxu0 0
    %312 = vmatprep.subr.bf16.mxu0 0
    %313 = vmatpush1.bf16.msra.mxu0 0
    %314 = vmatprep.subr.bf16.mxu0 0
    %315 = vmatpush1.bf16.msra.mxu0 0
    %316 = vmatprep.subr.bf16.mxu0 0
    %317 = vmatpush1.bf16.msra.mxu0 %v214
    %318 = vmatprep.subr.bf16.mxu0 0
    %319 = vmatpush2.bf16.msra.mxu0 0
    %320 = vmatprep.subr.bf16.mxu0 0
    %321 = vmatpush2.bf16.msra.mxu0 0
    %322 = vmatprep.subr.bf16.mxu0 0
    %323 = vmatpush2.bf16.msra.mxu0 0
    %324 = vmatprep.subr.bf16.mxu0 0
    %325 = vmatpush2.bf16.msra.mxu0 0
    %326 = vmatprep.subr.bf16.mxu0 0
    %327 = vmatpush2.bf16.msra.mxu0 0
    %328 = vmatprep.subr.bf16.mxu0 0
    %329 = vmatpush2.bf16.msra.mxu0 0
    %330 = vmatprep.subr.bf16.mxu0 0
    %331 = vmatpush2.bf16.msra.mxu0 0
    %332 = vmatprep.subr.bf16.mxu0 0
    %333 = vmatpush2.bf16.msra.mxu0 0
    %334 = vmatprep.mubr.bf16.mxu0 0
    %335 = vmatmul.mubr.bf16.gmra.mxu0 %v300
    %v336 = vpop.f32.mrf.mxu0
    %v337 = vadd.f32 0.0, %v336
    %v338 = vpop.f32.mrf.mxu0
    %v339 = vpop.f32.mrf.mxu0
    %v340 = vadd.f32 0.0, %v339
    %v341 = vpop.f32.mrf.mxu0
    %342 = vdwg.mxu0
    %v343 = vrcp.pop %v294
    %v344 = vrcp.pop %v297
    %v345 = vmul.f32 %v337, %v343
    %v346 = vmul.f32 %v340, %v344
    %v347 = vlaneseq
    %v348 = vshrl.u32 %v347, 7
    %v349 = vsub.s32 0, %v348
    %v350 = vrot.slane %v84, %v349
    %v351 = vadd.f32 %v345, %v350
    %v352 = vadd.f32 %v346, %v350
    %v353 = vmax.f32 %v351, 0.0
    %v354 = vmax.f32 %v352, 0.0
    %v355 = vpack.c.bf16 %v354, %v353
    %s356 = scalar_lea.vmem [#allocation5], 128
    %v357 = vld [vmem:[%s356] sm:$0xff]
    %v358 = vld [vmem:[%s356 + $0x8] sm:$0xff]
    %v359 = vld [vmem:[%s356 + $0x10] sm:$0xff]
    %v360 = vld [vmem:[%s356 + $0x18] sm:$0xff]
    %v361 = vld [vmem:[%s356 + $0x20] sm:$0xff]
    %v362 = vld [vmem:[%s356 + $0x28] sm:$0xff]
    %v363 = vld [vmem:[%s356 + $0x30] sm:$0xff]
    %v364 = vld [vmem:[%s356 + $0x38] sm:$0xff]
    %v365 = vld [vmem:[%s356 + $0x40] sm:$0xff]
    %v366 = vld [vmem:[%s356 + $0x48] sm:$0xff]
    %v367 = vld [vmem:[%s356 + $0x50] sm:$0xff]
    %v368 = vld [vmem:[%s356 + $0x58] sm:$0xff]
    %v369 = vld [vmem:[%s356 + $0x60] sm:$0xff]
    %v370 = vld [vmem:[%s356 + $0x68] sm:$0xff]
    %v371 = vld [vmem:[%s356 + $0x70] sm:$0xff]
    %v372 = vld [vmem:[%s356 + $0x78] sm:$0xff]
    %v373 = vld [vmem:[%s3 + $0x1] sm:$0x1]
    %v390 = vunpack.c.l.b16 %v357
    %v391 = vunpack.c.h.b16 %v357
    %v392 = vunpack.c.l.b16 %v358
    %v393 = vunpack.c.h.b16 %v358
    %v394 = vunpack.c.l.b16 %v359
    %v395 = vunpack.c.h.b16 %v359
    %v396 = vunpack.c.l.b16 %v360
    %v397 = vunpack.c.h.b16 %v360
    %v398 = vunpack.c.l.b16 %v361
    %v399 = vunpack.c.h.b16 %v361
    %v400 = vunpack.c.l.b16 %v362
    %v401 = vunpack.c.h.b16 %v362
    %v402 = vunpack.c.l.b16 %v363
    %v403 = vunpack.c.h.b16 %v363
    %v404 = vunpack.c.l.b16 %v364
    %v405 = vunpack.c.h.b16 %v364
    %v406 = vunpack.c.l.b16 %v365
    %v407 = vunpack.c.h.b16 %v365
    %v408 = vunpack.c.l.b16 %v366
    %v409 = vunpack.c.h.b16 %v366
    %v410 = vunpack.c.l.b16 %v367
    %v411 = vunpack.c.h.b16 %v367
    %v412 = vunpack.c.l.b16 %v368
    %v413 = vunpack.c.h.b16 %v368
    %v414 = vunpack.c.l.b16 %v369
    %v415 = vunpack.c.h.b16 %v369
    %v416 = vunpack.c.l.b16 %v370
    %v417 = vunpack.c.h.b16 %v370
    %v418 = vunpack.c.l.b16 %v371
    %v419 = vunpack.c.h.b16 %v371
    %v420 = vunpack.c.l.b16 %v372
    %v421 = vunpack.c.h.b16 %v372
    %v422 = vpack.c.b16 %v392, %v390
    %v423 = vpack.c.b16 %v393, %v391
    %v424 = vpack.c.b16 %v396, %v394
    %v425 = vpack.c.b16 %v397, %v395
    %v426 = vpack.c.b16 %v400, %v398
    %v427 = vpack.c.b16 %v401, %v399
    %v428 = vpack.c.b16 %v404, %v402
    %v429 = vpack.c.b16 %v405, %v403
    %v430 = vpack.c.b16 %v408, %v406
    %v431 = vpack.c.b16 %v409, %v407
    %v432 = vpack.c.b16 %v412, %v410
    %v433 = vpack.c.b16 %v413, %v411
    %v434 = vpack.c.b16 %v416, %v414
    %v435 = vpack.c.b16 %v417, %v415
    %v436 = vpack.c.b16 %v420, %v418
    %v437 = vpack.c.b16 %v421, %v419
    %454 = vmatprep.subr.bf16.mxu0 %v437
    %455 = vmatpush1.bf16.msra.mxu0 %v436
    %456 = vmatprep.subr.bf16.mxu0 %v435
    %457 = vmatpush1.bf16.msra.mxu0 %v434
    %458 = vmatprep.subr.bf16.mxu0 %v433
    %459 = vmatpush1.bf16.msra.mxu0 %v432
    %460 = vmatprep.subr.bf16.mxu0 %v431
    %461 = vmatpush1.bf16.msra.mxu0 %v430
    %462 = vmatprep.subr.bf16.mxu0 %v429
    %463 = vmatpush1.bf16.msra.mxu0 %v428
    %464 = vmatprep.subr.bf16.mxu0 %v427
    %465 = vmatpush1.bf16.msra.mxu0 %v426
    %466 = vmatprep.subr.bf16.mxu0 %v425
    %467 = vmatpush1.bf16.msra.mxu0 %v424
    %468 = vmatprep.subr.bf16.mxu0 %v423
    %469 = vmatpush1.bf16.msra.mxu0 %v422
    %470 = vmatprep.subr.bf16.mxu0 0
    %471 = vmatpush2.bf16.msra.mxu0 0
    %472 = vmatprep.subr.bf16.mxu0 0
    %473 = vmatpush2.bf16.msra.mxu0 0
    %474 = vmatprep.subr.bf16.mxu0 0
    %475 = vmatpush2.bf16.msra.mxu0 0
    %476 = vmatprep.subr.bf16.mxu0 0
    %477 = vmatpush2.bf16.msra.mxu0 0
    %478 = vmatprep.subr.bf16.mxu0 0
    %479 = vmatpush2.bf16.msra.mxu0 0
    %480 = vmatprep.subr.bf16.mxu0 0
    %481 = vmatpush2.bf16.msra.mxu0 0
    %482 = vmatprep.subr.bf16.mxu0 0
    %483 = vmatpush2.bf16.msra.mxu0 0
    %484 = vmatprep.subr.bf16.mxu0 0
    %485 = vmatpush2.bf16.msra.mxu0 0
    %486 = vmatprep.mubr.bf16.mxu0 0
    %487 = vmatmul.mubr.bf16.gmra.mxu0 %v355
    %v488 = vpop.f32.mrf.mxu0
    %v489 = vadd.f32 0.0, %v488
    %v490 = vpop.f32.mrf.mxu0
    %v491 = vadd.f32 0.0, %v490
    %v492 = vpop.f32.mrf.mxu0
    %v493 = vadd.f32 0.0, %v492
    %v494 = vpop.f32.mrf.mxu0
    %v495 = vadd.f32 0.0, %v494
    %496 = vdwg.mxu0
    %v497 = vpack.c.bf16 %v493, %v489
    %v500 = vunpack.c.l.s4 1966171168
    %v501 = vunpack.c.0.s8 %v500
    %v502 = vlaneseq
    %v503 = vshrl.u32 %v502, 7
    %v504 = vsub.s32 %v501, %v503
    %v505 = vrot.slane %v83, %v504
    %v507 = vunpack.c.l.s4 1966171168
    %v508 = vunpack.c.0.s8 %v507
    %v509 = vlaneseq
    %v510 = vshrl.u32 %v509, 7
    %v511 = vsub.s32 %v508, %v510
    %v512 = vrot.slane %v505, %v511
    %v514 = vshrl.u32 %v512, 16
    %517 = vmatprep.subr.bf16.mxu0 0
    %518 = vmatpush1.bf16.xpose.msra.mxu0 0
    %519 = vmatprep.subr.bf16.mxu0 0
    %520 = vmatpush1.bf16.xpose.msra.mxu0 0
    %521 = vmatprep.subr.bf16.mxu0 0
    %522 = vmatpush1.bf16.xpose.msra.mxu0 0
    %523 = vmatprep.subr.bf16.mxu0 0
    %524 = vmatpush1.bf16.xpose.msra.mxu0 0
    %525 = vmatprep.subr.bf16.mxu0 0
    %526 = vmatpush1.bf16.xpose.msra.mxu0 0
    %527 = vmatprep.subr.bf16.mxu0 0
    %528 = vmatpush1.bf16.xpose.msra.mxu0 0
    %529 = vmatprep.subr.bf16.mxu0 0
    %530 = vmatpush1.bf16.xpose.msra.mxu0 0
    %531 = vmatprep.subr.bf16.mxu0 0
    %532 = vmatpush1.bf16.xpose.msra.mxu0 %v497
    %533 = vmatprep.subr.bf16.mxu0 0
    %534 = vmatpush2.bf16.xpose.msra.mxu0 0
    %535 = vmatprep.subr.bf16.mxu0 0
    %536 = vmatpush2.bf16.xpose.msra.mxu0 0
    %537 = vmatprep.subr.bf16.mxu0 0
    %538 = vmatpush2.bf16.xpose.msra.mxu0 0
    %539 = vmatprep.subr.bf16.mxu0 0
    %540 = vmatpush2.bf16.xpose.msra.mxu0 0
    %541 = vmatprep.subr.bf16.mxu0 0
    %542 = vmatpush2.bf16.xpose.msra.mxu0 0
    %543 = vmatprep.subr.bf16.mxu0 0
    %544 = vmatpush2.bf16.xpose.msra.mxu0 0
    %545 = vmatprep.subr.bf16.mxu0 0
    %546 = vmatpush2.bf16.xpose.msra.mxu0 0
    %547 = vmatprep.subr.bf16.mxu0 0
    %548 = vmatpush2.bf16.xpose.msra.mxu0 0
    %549 = vmatprep.mubr.bf16.mxu0 0
    %550 = vmatmul.mubr.bf16.gmra.mxu0 %v514
    %v551 = vpop.f32.mrf.mxu0
    %v552 = vadd.f32 0.0, %v551
    %v553 = vpop.f32.mrf.mxu0
    %v554 = vpop.f32.mrf.mxu0
    %v555 = vpop.f32.mrf.mxu0
    %556 = vdwg.mxu0
    %558 = vset.pattern.permute.xlu0 0
    %559 = vperm.xlu0 %558, %v491
    %v560 = vpop.permute.xlu0 %559
    %563 = vset.pattern.permute.xlu0 0
    %564 = vperm.xlu0 %563, %v495
    %v565 = vpop.permute.xlu0 %564
    %v567 = vlaneseq
    %v568 = vshrl.u32 %v567, 7
    %v569 = vsub.s32 0, %v568
    %v570 = vrot.slane %v552, %v569
    %v571 = vadd.f32 %v560, %v570
    %v572 = vadd.f32 %v565, %v570
    %v573 = vmul.f32 %v571, 0.2
    %v574 = vmul.f32 %v572, 0.2
    %v575 = vmax.f32 %v571, %v573
    %v576 = vmax.f32 %v572, %v574
    %v577 = vadd.f32 %v575, %v275
    %v578 = vadd.f32 %v576, %v276
    %v579 = vsel %vm279, %v577, -inf
    %580 = vmax.xlane.f32.xlu0 %v579
    %v581 = vpop.xlane.xlu0 %580
    %v582 = vsel %vm279, %v578, -inf
    %583 = vmax.xlane.f32.xlu0 %v582
    %v584 = vpop.xlane.xlu0 %583
    %v585 = vsub.f32 %v577, %v581
    %v586 = vsub.f32 %v578, %v584
    %v587 = vmul.f32 %v585, 1.442695
    %v588 = vpow.pop %v587
    %v589 = vmul.f32 %v586, 1.442695
    %v590 = vpow.pop %v589
    %v591 = vsel %vm279, %v588, 0.0
    %592 = vadd.xlane.f32.xlu0 %v591
    %v593 = vpop.xlane.xlu0 %592
    %v594 = vsel %vm279, %v590, 0.0
    %595 = vadd.xlane.f32.xlu0 %v594
    %v596 = vpop.xlane.xlu0 %595
    %v597 = vpack.c.bf16 %v590, %v588
    %v599 = vsel %vm279, %v597, 0
    %601 = vmatprep.subr.bf16.mxu0 0
    %602 = vmatpush1.bf16.msra.mxu0 0
    %603 = vmatprep.subr.bf16.mxu0 0
    %604 = vmatpush1.bf16.msra.mxu0 0
    %605 = vmatprep.subr.bf16.mxu0 0
    %606 = vmatpush1.bf16.msra.mxu0 0
    %607 = vmatprep.subr.bf16.mxu0 0
    %608 = vmatpush1.bf16.msra.mxu0 0
    %609 = vmatprep.subr.bf16.mxu0 0
    %610 = vmatpush1.bf16.msra.mxu0 0
    %611 = vmatprep.subr.bf16.mxu0 0
    %612 = vmatpush1.bf16.msra.mxu0 0
    %613 = vmatprep.subr.bf16.mxu0 0
    %614 = vmatpush1.bf16.msra.mxu0 0
    %615 = vmatprep.subr.bf16.mxu0 0
    %616 = vmatpush1.bf16.msra.mxu0 %v497
    %617 = vmatprep.subr.bf16.mxu0 0
    %618 = vmatpush2.bf16.msra.mxu0 0
    %619 = vmatprep.subr.bf16.mxu0 0
    %620 = vmatpush2.bf16.msra.mxu0 0
    %621 = vmatprep.subr.bf16.mxu0 0
    %622 = vmatpush2.bf16.msra.mxu0 0
    %623 = vmatprep.subr.bf16.mxu0 0
    %624 = vmatpush2.bf16.msra.mxu0 0
    %625 = vmatprep.subr.bf16.mxu0 0
    %626 = vmatpush2.bf16.msra.mxu0 0
    %627 = vmatprep.subr.bf16.mxu0 0
    %628 = vmatpush2.bf16.msra.mxu0 0
    %629 = vmatprep.subr.bf16.mxu0 0
    %630 = vmatpush2.bf16.msra.mxu0 0
    %631 = vmatprep.subr.bf16.mxu0 0
    %632 = vmatpush2.bf16.msra.mxu0 0
    %633 = vmatprep.mubr.bf16.mxu0 0
    %634 = vmatmul.mubr.bf16.gmra.mxu0 %v599
    %v635 = vpop.f32.mrf.mxu0
    %v636 = vadd.f32 0.0, %v635
    %v637 = vpop.f32.mrf.mxu0
    %v638 = vpop.f32.mrf.mxu0
    %v639 = vadd.f32 0.0, %v638
    %v640 = vpop.f32.mrf.mxu0
    %641 = vdwg.mxu0
    %v642 = vrcp.pop %v593
    %v643 = vrcp.pop %v596
    %v644 = vmul.f32 %v636, %v642
    %v645 = vmul.f32 %v639, %v643
    %v646 = vlaneseq
    %v647 = vshrl.u32 %v646, 7
    %v648 = vsub.s32 0, %v647
    %v649 = vrot.slane %v373, %v648
    %v650 = vadd.f32 %v644, %v649
    %v651 = vadd.f32 %v645, %v649
    %652 = vst [vmem:[#allocation8] sm:$0xff] %v650
    %653 = vst [vmem:[#allocation8 + $0x8] sm:$0xff] %v651
    // Predicated region
    $region34: #{tpu_custom_call.1} parent=1 // pred_check
      _
    $region35: #{tpu_custom_call.1} parent=1 // pred_check_branch
      %655 = sbr.rel (0) target = $region37
    $region36: #{tpu_custom_call.1} parent=1 // pred_region
      %s657 = ssub.s32 256, 256
      %658 = vsyncadd [#allocation4], %s657
      %s659 = sshll.u32 [#allocation8], 4
      %s660 = int_to_ptr.vmem [resolvable:$true] %s659
      %665 = dma.vmem_to_hbm [thread:$0]  %s660, 256, %s5, [#allocation4], 128, 128, 8
    $region37: #{tpu_custom_call.1} parent=1 // pred_fallthru
      _
    // Predicated region
    $region38: #{tpu_custom_call.1} parent=1 // pred_check
      _
    $region39: #{tpu_custom_call.1} parent=1 // pred_check_branch
      %667 = sbr.rel (0) target = $region41
    $region40: #{tpu_custom_call.1} parent=1 // pred_region
      %668 = dma.done [#allocation4], 256
    $region41: #{tpu_custom_call.1} parent=1 // pred_fallthru
      _
    %669 = vsyncpa [#allocation3], 1
    %670 = vsyncpa [#allocation6], 1
    %671 = vsyncpa [#allocation4], 1

</llo_original>
